<compile_context>
chip_gen: v7x
topology: tpu7x:2x2x1
jax: 0.10.0
libtpu: 0.0.40
codegen_flags: <defaults>
</compile_context>

<pallas_src>
import math

import jax
import jax.numpy as jnp
from jax.experimental import pallas as pl
from jax.experimental.pallas import tpu as pltpu


# ----------------------------------------------------------------------------
# Fused kernel: one output tile = single fused 1x1-conv matmul + bias
# ----------------------------------------------------------------------------
def fpn_fused_kernel(x_ref, w_ref, b_ref, o_ref):
    # x_ref: (1, Kc, HWT)  compute dtype  [upsampled C5 ; C4], flat H*W on lanes
    # w_ref: (1, CT, Kc)   compute dtype  per-batch fused weight [w5 | scale*w4]
    # b_ref: (1, CT, 1)    f32            per-batch fused bias    b5 + scale*b4
    # o_ref: (1, CT, HWT)  f32
    o_ref[0] = jnp.dot(w_ref[0], x_ref[0],
                       preferred_element_type=jnp.float32) + b_ref[0]


def _choose_ct(out_ch, cap=256):
    """Largest divisor of out_ch that is a multiple of 8 and <= cap."""
    if out_ch <= cap:
        return out_ch
    best = None
    for ct in range(8, cap + 1, 8):
        if out_ch % ct == 0:
            best = ct
    return best if best is not None else out_ch


def _choose_hw_tile(hw, max_lanes):
    """Largest divisor of hw that is a multiple of 128 and <= max_lanes."""
    if hw <= max_lanes:
        return hw
    best = None
    for t in range(128, max_lanes + 1, 128):
        if hw % t == 0:
            best = t
    return best if best is not None else hw  # fallback: full HW (VMEM assert below)


# ----------------------------------------------------------------------------
# FPN forward (NCHW in / NCHW out, like the PyTorch module)
# ----------------------------------------------------------------------------
def fpn_forward(C4_nchw, C5_nchw, params, *, max_tile_lanes=4096,
                vmem_limit_bytes=48 * 1024 * 1024,
                compute_dtype=jnp.bfloat16):
    w4, b4 = params["w4"], params["b4"]      # (OUT, C4in), (OUT,)
    w5, b5 = params["w5"], params["b5"]      # (OUT, C5in), (OUT,)
    fc1, fc2 = params["fc1"], params["fc2"]  # (OUT, RED), (RED, OUT) (bias-free SE)

    B, C4in, H4, W4 = C4_nchw.shape
    _, C5in, H5, W5 = C5_nchw.shape
    OUT = w4.shape[0]
    assert H4 == 2 * H5 and W4 == 2 * W5, "upsampled P5 must match P4 spatial size"
    HW4 = H4 * W4
    Kc = C5in + C4in

    f32 = jnp.float32
    C4f = C4_nchw.astype(f32)

    # ---- tiny prologue: SE squeeze hoist + weight/bias folding ---------------
    # mean_hw(conv1x1(C4)) == mean_hw(C4) @ w4^T + b4   (FP reassociation only)
    pooled = jnp.mean(C4f, axis=(2, 3)) @ w4.T + b4                    # (B, OUT)
    scale = jax.nn.sigmoid(jnp.maximum(pooled @ fc1, 0.0) @ fc2)       # (B, OUT)

    # Fold SE scale into the P4 conv and fuse both 1x1 convs into one K=Kc matmul
    w_cat = jnp.concatenate(
        [jnp.broadcast_to(w5, (B, OUT, C5in)),
         scale[:, :, None] * w4[None]], axis=2).astype(compute_dtype)  # (B, OUT, Kc)
    b_cat = (b5[None, :] + scale * b4[None, :]).reshape(B, OUT, 1)     # (B, OUT, 1) f32

    # 2x nearest upsample of the *raw* C5 (only C5in channels -> cheap), then
    # channel-concat with C4; this is the only activation the kernel streams.
    c5_up = jnp.repeat(jnp.repeat(C5_nchw.astype(f32), 2, axis=2), 2, axis=3)
    x_cat = jnp.concatenate([c5_up, C4f], axis=1)                      # (B, Kc, H4, W4)
    x_cat = x_cat.reshape(B, Kc, HW4).astype(compute_dtype)            # free reshape

    # ---- tiling ---------------------------------------------------------------
    CT = _choose_ct(OUT)
    HWT = _choose_hw_tile(HW4, max_tile_lanes)
    assert OUT % CT == 0 and HW4 % HWT == 0
    n_co, n_t = OUT // CT, HW4 // HWT

    # explicit VMEM budget check: double-buffered I/O tiles + f32 matmul result
    isz = jnp.dtype(compute_dtype).itemsize
    vmem_need = (2 * (Kc * HWT * isz + CT * Kc * isz + CT * 4 + CT * HWT * 4)
                 + CT * HWT * 4)
    assert vmem_need <= vmem_limit_bytes, (vmem_need, vmem_limit_bytes)

    cost = pl.CostEstimate(
        flops=int(2 * B * OUT * Kc * HW4),
        transcendentals=0,
        bytes_accessed=int(n_co * x_cat.size * isz + w_cat.size * isz
                           + b_cat.size * 4 + B * OUT * HW4 * 4),
    )

    out_flat = pl.pallas_call(
        fpn_fused_kernel,
        out_shape=jax.ShapeDtypeStruct((B, OUT, HW4), jnp.float32),
        grid_spec=pltpu.PrefetchScalarGridSpec(
            num_scalar_prefetch=0,
            grid=(B, n_co, n_t),                 # spatial tiles vary fastest
            in_specs=[
                pl.BlockSpec((1, Kc, HWT), lambda b, co, t: (b, 0, t)),
                pl.BlockSpec((1, CT, Kc), lambda b, co, t: (b, co, 0)),
                pl.BlockSpec((1, CT, 1), lambda b, co, t: (b, co, 0)),
            ],
            out_specs=pl.BlockSpec((1, CT, HWT), lambda b, co, t: (b, co, t)),
        ),
        compiler_params=pltpu.CompilerParams(
            dimension_semantics=("parallel", "parallel", "parallel"),
            vmem_limit_bytes=vmem_limit_bytes,
        ),
        cost_estimate=cost,
    )(x_cat, w_cat, b_cat)

    return out_flat.reshape(B, OUT, H4, W4)      # free reshape back to NCHW


# ----------------------------------------------------------------------------
# Pure-JAX reference (mirrors the PyTorch module, full f32)
# ----------------------------------------------------------------------------
def fpn_reference(C4, C5, params):
    w4, b4 = params["w4"], params["b4"]
    w5, b5 = params["w5"], params["b5"]
    fc1, fc2 = params["fc1"], params["fc2"]
    p5 = jnp.einsum("oc,bchw->bohw", w5, C5) + b5[None, :, None, None]
    p5_up = jnp.repeat(jnp.repeat(p5, 2, axis=2), 2, axis=3)
    p4 = jnp.einsum("oc,bchw->bohw", w4, C4) + b4[None, :, None, None]
    pooled = jnp.mean(p4, axis=(2, 3))
    scale = jax.nn.sigmoid(jnp.maximum(pooled @ fc1, 0.0) @ fc2)
    return p5_up + p4 * scale[:, :, None, None]


if __name__ == "__main__":
    # small shapes consistent with FPN(in_channels=(C4_size, C5_size), out_channel=256)
    B = 2
    C4_SIZE, C5_SIZE = 8, 16
    H5 = W5 = 8
    H4 = W4 = 16            # upsampled P5 must match P4 spatial size
    OUT = 256
    RED = OUT // 16         # SELayer default reduction=16

    key = jax.random.PRNGKey(0)
    k = jax.random.split(key, 8)

    # conv weights in PyTorch layout (OUT, Cin); biases (OUT,)
    std = math.sqrt(2.0 / (1 * 1 * OUT))   # matches m.weight.data.normal_(0, sqrt(2/n))
    params = {
        "w5": jax.random.normal(k[0], (OUT, C5_SIZE), jnp.float32) * std,
        "b5": jax.random.normal(k[1], (OUT,), jnp.float32) * 0.01,
        "w4": jax.random.normal(k[2], (OUT, C4_SIZE), jnp.float32) * std,
        "b4": jax.random.normal(k[3], (OUT,), jnp.float32) * 0.01,
        # SELayer Linear layers (bias-free), stored as (in, out) for x @ W
        "fc1": jax.random.normal(k[4], (OUT, RED), jnp.float32) * 0.05,
        "fc2": jax.random.normal(k[5], (RED, OUT), jnp.float32) * 0.05,
    }

    C4 = jax.random.normal(k[6], (B, C4_SIZE, H4, W4), jnp.float32)
    C5 = jax.random.normal(k[7], (B, C5_SIZE, H5, W5), jnp.float32)

    ref = fpn_reference(C4, C5, params)

    # 1) full-f32 kernel variant: tight check against the f32 reference
    out_f32 = jax.jit(
        lambda a, b, p: fpn_forward(a, b, p, compute_dtype=jnp.float32)
    )(C4, C5, params)
    out_f32 = jax.block_until_ready(out_f32)
    assert out_f32.shape == (B, OUT, H4, W4), out_f32.shape
    assert jnp.allclose(out_f32, ref, atol=5e-4, rtol=5e-4), float(
        jnp.max(jnp.abs(out_f32 - ref)))

    # 2) default bf16-MXU-input variant (the fast path): looser tolerance,
    #    consistent with bf16 operand quantization (f32 accumulate + f32 output)
    out = jax.jit(fpn_forward)(C4, C5, params)
    out = jax.block_until_ready(out)
    assert out.shape == (B, OUT, H4, W4), out.shape
    assert jnp.allclose(out, ref, atol=3e-2, rtol=3e-2), float(
        jnp.max(jnp.abs(out - ref)))

    print("KERNEL_OK")
</pallas_src>

<mosaic_0001>
module attributes {stable_mosaic.version = 11 : i64} {
  func.func @fpn_fused_kernel(%arg0: i32, %arg1: i32, %arg2: i32, %arg3: memref<1x24x256xf32, #tpu.memory_space<vmem>>, %arg4: memref<1x256x24xf32, #tpu.memory_space<vmem>>, %arg5: memref<1x256x1xf32, #tpu.memory_space<vmem>>, %arg6: memref<1x256x256xf32, #tpu.memory_space<vmem>>) attributes {dimension_semantics = [#tpu.dimension_semantics<parallel>, #tpu.dimension_semantics<parallel>, #tpu.dimension_semantics<parallel>], iteration_bounds = array<i64: 2, 1, 1>, scalar_prefetch = 0 : i64, scratch_operands = 0 : i64, tpu.core_type = #tpu.core_type<tc>, window_params = [{transform_indices = @transform_0, window_bounds = array<i64: 1, 24, 256>}, {transform_indices = @transform_1, window_bounds = array<i64: 1, 256, 24>}, {transform_indices = @transform_2, window_bounds = array<i64: 1, 256, 1>}, {transform_indices = @transform_3, window_bounds = array<i64: 1, 256, 256>}]} {
    %c0 = arith.constant 0 : index
    %c0_0 = arith.constant 0 : index
    %c0_1 = arith.constant 0 : index
    %0 = vector.load %arg4[%c0, %c0_0, %c0_1] : memref<1x256x24xf32, #tpu.memory_space<vmem>>, vector<1x256x24xf32>
    %1 = vector.shape_cast %0 : vector<1x256x24xf32> to vector<256x24xf32>
    %c0_2 = arith.constant 0 : index
    %c0_3 = arith.constant 0 : index
    %c0_4 = arith.constant 0 : index
    %2 = vector.load %arg3[%c0_2, %c0_3, %c0_4] : memref<1x24x256xf32, #tpu.memory_space<vmem>>, vector<1x24x256xf32>
    %3 = vector.shape_cast %2 : vector<1x24x256xf32> to vector<24x256xf32>
    %cst = arith.constant dense<0.000000e+00> : vector<256x256xf32>
    %4 = tpu.matmul %1, %3, %cst {dimension_numbers = #tpu.dot_dimension_numbers<[1], [0], [0], [1], [0, 0, 1, 1], [], []>} : vector<256x24xf32>, vector<24x256xf32>, vector<256x256xf32> -> vector<256x256xf32>
    %c0_5 = arith.constant 0 : index
    %c0_6 = arith.constant 0 : index
    %c0_7 = arith.constant 0 : index
    %5 = vector.load %arg5[%c0_5, %c0_6, %c0_7] : memref<1x256x1xf32, #tpu.memory_space<vmem>>, vector<1x256x1xf32>
    %6 = vector.shape_cast %5 : vector<1x256x1xf32> to vector<256x1xf32>
    %7 = vector.broadcast %6 : vector<256x1xf32> to vector<256x256xf32>
    %8 = arith.addf %4, %7 : vector<256x256xf32>
    %c0_8 = arith.constant 0 : index
    %c0_9 = arith.constant 0 : index
    %c0_10 = arith.constant 0 : index
    %9 = vector.load %arg6[%c0_8, %c0_9, %c0_10] : memref<1x256x256xf32, #tpu.memory_space<vmem>>, vector<1x256x256xf32>
    %10 = vector.shape_cast %9 : vector<1x256x256xf32> to vector<256x256xf32>
    %11 = vector.shape_cast %8 : vector<256x256xf32> to vector<1x256x256xf32>
    tpu.vector_store %arg6[%c0_8, %c0_9, %c0_10], %11 {strides = array<i32>} : memref<1x256x256xf32, #tpu.memory_space<vmem>>, vector<1x256x256xf32>,
    return
  }
  func.func @transform_0(%arg0: i32, %arg1: i32, %arg2: i32) -> (i32, i32, i32) {
    %c0_i32 = arith.constant 0 : i32
    %c0_i32_0 = arith.constant 0 : i32
    return %arg0, %c0_i32, %arg2 : i32, i32, i32
  }
  func.func @transform_1(%arg0: i32, %arg1: i32, %arg2: i32) -> (i32, i32, i32) {
    %c0_i32 = arith.constant 0 : i32
    %c0_i32_0 = arith.constant 0 : i32
    return %arg0, %arg1, %c0_i32 : i32, i32, i32
  }
  func.func @transform_2(%arg0: i32, %arg1: i32, %arg2: i32) -> (i32, i32, i32) {
    %c0_i32 = arith.constant 0 : i32
    %c0_i32_0 = arith.constant 0 : i32
    return %arg0, %arg1, %c0_i32 : i32, i32, i32
  }
  func.func @transform_3(%arg0: i32, %arg1: i32, %arg2: i32) -> (i32, i32, i32) {
    %c0_i32 = arith.constant 0 : i32
    return %arg0, %arg1, %arg2 : i32, i32, i32
  }
}

</mosaic_0001>

<llo_original>
// kernel: _lambda_.1
$region0: #{_lambda_.1}
  #allocation0 [shape = 'u32[]', space=smem, size = 0x4, offset = 0x4, fixed_abs, tag = 'smem constant byte address 0x4 - core index']
  #allocation1 [shape = 'u32[144,128]{1,0:T(1,128)}', space=vmem, size = 0x12000, scoped, tag = 'internal scratch']
  %s0 = inlined_call_operand.vmem [shape: f32[2,24,256], index: 0, kind: input, shape index: {}]
  %s1 = inlined_call_operand.vmem [shape: f32[2,256,24], index: 1, kind: input, shape index: {}]
  %s2 = inlined_call_operand.vmem [shape: f32[2,256,1], index: 2, kind: input, shape index: {}]
  %s3 = inlined_call_operand.vmem [shape: f32[2,256,256], index: 3, kind: output, shape index: {}]
  %s4 = sld [smem:[#allocation0]]
  $region45: #{_lambda_.1} parent=0
    _
  %s6 = ssub.s32 1, %s4
  %s7 = scalar_select 0, %s6, %s4
  loop: start=0, step=1, limit=4
  $region2: #{_lambda_.1} parent=0 // loop_pre_header
    _
  $region3: #{_lambda_.1} parent=0 // loop_header
    %s9 = sphi 0, %s13
    %p10 = scmp.ge.s32.totalorder %s9, 4
    %s16 = sphi 0, %s35
    %s17 = sphi 0, %s31
    %s18 = sphi 0, %s27
    %s19 = sphi 0, %s16
    %s20 = sphi 0, %s17
    %s21 = sphi 0, %s18
    %s22 = sphi 0, %s19
    %s23 = sphi 0, %s20
    %s24 = sphi 0, %s21
    %s40 = sphi 0, %s42
    %s43 = sphi 0, %s40
    %s44 = sphi 0, %s43
    %s60 = sphi 0, %s44
    %s68 = sphi 0, %s70
    %s71 = sphi 0, %s68
    %s72 = sphi 0, %s71
    %s88 = sphi 0, %s72
    %s96 = sphi 0, %s98
    %s99 = sphi 0, %s96
    %s100 = sphi 0, %s99
    %s116 = sphi 0, %s100
    %s126 = sphi 0, %s128
    %s129 = sphi 0, %s126
    %s130 = sphi 0, %s129
    %s146 = sphi 0, %s130
  $region4: #{_lambda_.1} parent=0 // loop_header_branch
    %12 = sbr.rel (%p10) target = $region8
  $region5: #{_lambda_.1} parent=0 // loop_body
    %s14 = ssub.s32 %s9, 1
    %s15 = ssub.s32 %s9, 2
    %s25 = sadd.s32 1, %s18
    %p26 = scmp.ge.s32.totalorder %s25, 1
    %s27 = scalar_select %p26, 0, %s25
    %s28 = sadd.s32 1, %s17
    %s29 = scalar_select %p26, %s28, %s17
    %p30 = scmp.ge.s32.totalorder %s29, 1
    %s31 = scalar_select %p30, 0, %s29
    %s32 = sadd.s32 1, %s16
    %s33 = scalar_select %p30, %s32, %s16
    %p34 = scmp.ge.s32.totalorder %s33, 2
    %s35 = scalar_select %p34, 0, %s33
    %s36 = ssub.s32 %s16, %s35
    %s37 = ssub.s32 %s18, %s27
    %s38 = sor.u32 %s36, %s37
    %p39 = scmp.eq.s32.totalorder %s38, 0
    %s41 = sadd.s32 %s40, 1
    %s42 = scalar_select %p39, %s40, %s41
    %p45 = pneg %p39
    %p46 = scmp.eq.s32.totalorder %s9, 1
    %p47 = por %p45, %p46
    %p48 = scmp.ne.s32.totalorder %s40, %s43
    %p49 = scmp.eq.s32.totalorder %s9, 0
    %p50 = por %p48, %p49
    %p51 = scmp.ne.s32.totalorder %s40, %s43
    %p52 = scmp.eq.s32.totalorder %s14, 1
    %p53 = por %p51, %p52
    %p54 = scmp.ne.s32.totalorder %s43, %s44
    %p55 = scmp.eq.s32.totalorder %s14, 0
    %p56 = por %p54, %p55
    %p57 = scmp.ne.s32.totalorder %s43, %s44
    %p58 = scmp.eq.s32.totalorder %s15, 1
    %p59 = por %p57, %p58
    %p61 = scmp.ne.s32.totalorder %s44, %s60
    %p62 = scmp.eq.s32.totalorder %s15, 0
    %p63 = por %p61, %p62
    %s64 = ssub.s32 %s16, %s35
    %s65 = ssub.s32 %s17, %s31
    %s66 = sor.u32 %s64, %s65
    %p67 = scmp.eq.s32.totalorder %s66, 0
    %s69 = sadd.s32 %s68, 1
    %s70 = scalar_select %p67, %s68, %s69
    %p73 = pneg %p67
    %p74 = scmp.eq.s32.totalorder %s9, 1
    %p75 = por %p73, %p74
    %p76 = scmp.ne.s32.totalorder %s68, %s71
    %p77 = scmp.eq.s32.totalorder %s9, 0
    %p78 = por %p76, %p77
    %p79 = scmp.ne.s32.totalorder %s68, %s71
    %p80 = scmp.eq.s32.totalorder %s14, 1
    %p81 = por %p79, %p80
    %p82 = scmp.ne.s32.totalorder %s71, %s72
    %p83 = scmp.eq.s32.totalorder %s14, 0
    %p84 = por %p82, %p83
    %p85 = scmp.ne.s32.totalorder %s71, %s72
    %p86 = scmp.eq.s32.totalorder %s15, 1
    %p87 = por %p85, %p86
    %p89 = scmp.ne.s32.totalorder %s72, %s88
    %p90 = scmp.eq.s32.totalorder %s15, 0
    %p91 = por %p89, %p90
    %s92 = ssub.s32 %s16, %s35
    %s93 = ssub.s32 %s17, %s31
    %s94 = sor.u32 %s92, %s93
    %p95 = scmp.eq.s32.totalorder %s94, 0
    %s97 = sadd.s32 %s96, 1
    %s98 = scalar_select %p95, %s96, %s97
    %p101 = pneg %p95
    %p102 = scmp.eq.s32.totalorder %s9, 1
    %p103 = por %p101, %p102
    %p104 = scmp.ne.s32.totalorder %s96, %s99
    %p105 = scmp.eq.s32.totalorder %s9, 0
    %p106 = por %p104, %p105
    %p107 = scmp.ne.s32.totalorder %s96, %s99
    %p108 = scmp.eq.s32.totalorder %s14, 1
    %p109 = por %p107, %p108
    %p110 = scmp.ne.s32.totalorder %s99, %s100
    %p111 = scmp.eq.s32.totalorder %s14, 0
    %p112 = por %p110, %p111
    %p113 = scmp.ne.s32.totalorder %s99, %s100
    %p114 = scmp.eq.s32.totalorder %s15, 1
    %p115 = por %p113, %p114
    %p117 = scmp.ne.s32.totalorder %s100, %s116
    %p118 = scmp.eq.s32.totalorder %s15, 0
    %p119 = por %p117, %p118
    %s120 = ssub.s32 %s16, %s35
    %s121 = ssub.s32 %s17, %s31
    %s122 = sor.u32 %s120, %s121
    %s123 = ssub.s32 %s18, %s27
    %s124 = sor.u32 %s122, %s123
    %p125 = scmp.eq.s32.totalorder %s124, 0
    %s127 = sadd.s32 %s126, 1
    %s128 = scalar_select %p125, %s126, %s127
    %p131 = pneg %p125
    %p132 = scmp.eq.s32.totalorder %s9, 1
    %p133 = por %p131, %p132
    %p134 = scmp.ne.s32.totalorder %s126, %s129
    %p135 = scmp.eq.s32.totalorder %s9, 0
    %p136 = por %p134, %p135
    %p137 = scmp.ne.s32.totalorder %s126, %s129
    %p138 = scmp.eq.s32.totalorder %s14, 1
    %p139 = por %p137, %p138
    %p140 = scmp.ne.s32.totalorder %s129, %s130
    %p141 = scmp.eq.s32.totalorder %s14, 0
    %p142 = por %p140, %p141
    %p143 = scmp.ne.s32.totalorder %s129, %s130
    %p144 = scmp.eq.s32.totalorder %s15, 1
    %p145 = por %p143, %p144
    %p147 = scmp.ne.s32.totalorder %s130, %s146
    %p148 = scmp.eq.s32.totalorder %s15, 0
    %p149 = por %p147, %p148
    %p150 = scmp.le.s32.totalorder 1, %s9
    %p151 = scmp.lt.s32.totalorder %s9, 3
    %p152 = pnand %p150, %p151
    %p153 = pneg %p152
    // Predicated region
    $region9: #{_lambda_.1} parent=5 // pred_check
      _
    $region10: #{_lambda_.1} parent=5 // pred_check_branch
      %155 = sbr.rel (%p152) target = $region12
    $region11: #{_lambda_.1} parent=5 // pred_region
      %s156 = ssub.s32 %s9, 1
    $region12: #{_lambda_.1} parent=5 // pred_fallthru
      _
    %p157 = scmp.lt.s32.totalorder %s9, 2
    // Predicated region
    $region13: #{_lambda_.1} parent=5 // pred_check
      %p158 = pneg %p157
    $region14: #{_lambda_.1} parent=5 // pred_check_branch
      %160 = sbr.rel (%p158) target = $region16
    $region15: #{_lambda_.1} parent=5 // pred_region
      // Predicated region
      $region17: #{_lambda_.1} parent=15 // pred_check
        %p161 = pneg %p50
      $region18: #{_lambda_.1} parent=15 // pred_check_branch
        %163 = sbr.rel (%p161) target = $region20
      $region19: #{_lambda_.1} parent=15 // pred_region
        %s164 = smul.u32 2, %s18
        %p165 = scmp.lt.s32.totalorder %s16, 1
        %s166 = scalar_select %p165, %s16, 1
        %p167 = scmp.lt.s32.totalorder %s164, 1
        %s168 = scalar_select %p167, %s164, 1
        %s169 = smul.addr %s166, 6
        %s170 = sadd.s32 %s168, %s169
        %s171 = smul.addr %s170, 8
        %s172 = scalar_lea.vmem %s0, %s171
        %s173 = smul.u32 2, %s18
      $region20: #{_lambda_.1} parent=15 // pred_fallthru
        _
      // Predicated region
      $region21: #{_lambda_.1} parent=15 // pred_check
        %p174 = pneg %p78
      $region22: #{_lambda_.1} parent=15 // pred_check_branch
        %176 = sbr.rel (%p174) target = $region24
      $region23: #{_lambda_.1} parent=15 // pred_region
        %s177 = smul.u32 32, %s17
        %p178 = scmp.lt.s32.totalorder %s16, 1
        %s179 = scalar_select %p178, %s16, 1
        %p180 = scmp.lt.s32.totalorder %s177, 31
        %s181 = scalar_select %p180, %s177, 31
        %s182 = smul.addr %s179, 32
        %s183 = sadd.s32 %s181, %s182
        %s184 = smul.addr %s183, 8
        %s185 = scalar_lea.vmem %s1, %s184
        %s186 = smul.u32 32, %s17
      $region24: #{_lambda_.1} parent=15 // pred_fallthru
        _
      // Predicated region
      $region25: #{_lambda_.1} parent=15 // pred_check
        %p187 = pneg %p106
      $region26: #{_lambda_.1} parent=15 // pred_check_branch
        %189 = sbr.rel (%p187) target = $region28
      $region27: #{_lambda_.1} parent=15 // pred_region
        %s190 = smul.u32 32, %s17
        %p191 = scmp.lt.s32.totalorder %s16, 1
        %s192 = scalar_select %p191, %s16, 1
        %p193 = scmp.lt.s32.totalorder %s190, 31
        %s194 = scalar_select %p193, %s190, 31
        %s195 = smul.addr %s192, 32
        %s196 = sadd.s32 %s194, %s195
        %s197 = smul.addr %s196, 8
        %s198 = scalar_lea.vmem %s2, %s197
        %s199 = smul.u32 32, %s17
      $region28: #{_lambda_.1} parent=15 // pred_fallthru
        _
    $region16: #{_lambda_.1} parent=5 // pred_fallthru
      _
    %p200 = scmp.le.s32.totalorder 1, %s9
    %p201 = scmp.lt.s32.totalorder %s9, 3
    %p202 = pnand %p200, %p201
    %p203 = pneg %p202
    // Predicated region
    $region29: #{_lambda_.1} parent=5 // pred_check
      _
    $region30: #{_lambda_.1} parent=5 // pred_check_branch
      %205 = sbr.rel (%p202) target = $region32
    $region31: #{_lambda_.1} parent=5 // pred_region
      %s206 = ssub.s32 %s9, 1
      %s207 = smul.u32 2, %s21
      %p208 = scmp.lt.s32.totalorder %s19, 1
      %s209 = scalar_select %p208, %s19, 1
      %p210 = scmp.lt.s32.totalorder %s207, 1
      %s211 = scalar_select %p210, %s207, 1
      %s212 = smul.addr %s209, 6
      %s213 = sadd.s32 %s211, %s212
      %s214 = smul.addr %s213, 8
      %s215 = scalar_lea.vmem %s0, %s214
      %p216 = pneg %p56
      %p217 = pneg %p53
      %s218 = smul.u32 32, %s20
      %p219 = scmp.lt.s32.totalorder %s19, 1
      %s220 = scalar_select %p219, %s19, 1
      %p221 = scmp.lt.s32.totalorder %s218, 31
      %s222 = scalar_select %p221, %s218, 31
      %s223 = smul.addr %s220, 32
      %s224 = sadd.s32 %s222, %s223
      %s225 = smul.addr %s224, 8
      %s226 = scalar_lea.vmem %s1, %s225
      %p227 = pneg %p84
      %p228 = pneg %p81
      %s229 = smul.u32 32, %s20
      %p230 = scmp.lt.s32.totalorder %s19, 1
      %s231 = scalar_select %p230, %s19, 1
      %p232 = scmp.lt.s32.totalorder %s229, 31
      %s233 = scalar_select %p232, %s229, 31
      %s234 = smul.addr %s231, 32
      %s235 = sadd.s32 %s233, %s234
      %s236 = smul.addr %s235, 8
      %s237 = scalar_lea.vmem %s2, %s236
      %p238 = pneg %p112
      %p239 = pneg %p109
      %p240 = pneg %p142
      %p241 = pneg %p139
      %s242 = smul.u32 32, %s20
      %s243 = smul.u32 2, %s21
      %p244 = scmp.lt.s32.totalorder %s19, 1
      %s245 = scalar_select %p244, %s19, 1
      %p246 = scmp.lt.s32.totalorder %s242, 31
      %s247 = scalar_select %p246, %s242, 31
      %p248 = scmp.lt.s32.totalorder %s243, 1
      %s249 = scalar_select %p248, %s243, 1
      %s250 = smul.addr %s247, 2
      %s251 = sadd.s32 %s249, %s250
      %s252 = smul.addr %s245, 64
      %s253 = sadd.s32 %s251, %s252
      %s254 = smul.addr %s253, 8
      %s255 = scalar_lea.vmem %s3, %s254
      %s256 = smul.u32 2, %s21
      %p257 = scmp.lt.s32.totalorder %s19, 1
      %s258 = scalar_select %p257, %s19, 1
      %p259 = scmp.lt.s32.totalorder %s256, 1
      %s260 = scalar_select %p259, %s256, 1
      %s261 = smul.addr %s258, 6
      %s262 = sadd.s32 %s260, %s261
      %s263 = smul.addr %s262, 8
      %s264 = scalar_lea.vmem %s0, %s263
      %s265 = smul.u32 2, %s21
      %s266 = smul.u32 32, %s20
      %p267 = scmp.lt.s32.totalorder %s19, 1
      %s268 = scalar_select %p267, %s19, 1
      %p269 = scmp.lt.s32.totalorder %s266, 31
      %s270 = scalar_select %p269, %s266, 31
      %s271 = smul.addr %s268, 32
      %s272 = sadd.s32 %s270, %s271
      %s273 = smul.addr %s272, 8
      %s274 = scalar_lea.vmem %s1, %s273
      %s275 = smul.u32 32, %s20
      %s276 = smul.u32 32, %s20
      %p277 = scmp.lt.s32.totalorder %s19, 1
      %s278 = scalar_select %p277, %s19, 1
      %p279 = scmp.lt.s32.totalorder %s276, 31
      %s280 = scalar_select %p279, %s276, 31
      %s281 = smul.addr %s278, 32
      %s282 = sadd.s32 %s280, %s281
      %s283 = smul.addr %s282, 8
      %s284 = scalar_lea.vmem %s2, %s283
      %s285 = smul.u32 32, %s20
      %s286 = smul.u32 32, %s20
      %s287 = smul.u32 2, %s21
      %p288 = scmp.lt.s32.totalorder %s19, 1
      %s289 = scalar_select %p288, %s19, 1
      %p290 = scmp.lt.s32.totalorder %s286, 31
      %s291 = scalar_select %p290, %s286, 31
      %p292 = scmp.lt.s32.totalorder %s287, 1
      %s293 = scalar_select %p292, %s287, 1
      %s294 = smul.addr %s291, 2
      %s295 = sadd.s32 %s293, %s294
      %s296 = smul.addr %s289, 64
      %s297 = sadd.s32 %s295, %s296
      %s298 = smul.addr %s297, 8
      %s299 = scalar_lea.vmem %s3, %s298
      %s300 = smul.u32 32, %s20
      %s301 = smul.u32 2, %s21
      %v302 = vld [vmem:[%s274] sm:$0xff]
      %v303 = vld [vmem:[%s274 + $0x8] sm:$0xff]
      %v304 = vld [vmem:[%s274 + $0x10] sm:$0xff]
      %v305 = vld [vmem:[%s274 + $0x18] sm:$0xff]
      %v306 = vld [vmem:[%s274 + $0x20] sm:$0xff]
      %v307 = vld [vmem:[%s274 + $0x28] sm:$0xff]
      %v308 = vld [vmem:[%s274 + $0x30] sm:$0xff]
      %v309 = vld [vmem:[%s274 + $0x38] sm:$0xff]
      %v310 = vld [vmem:[%s274 + $0x40] sm:$0xff]
      %v311 = vld [vmem:[%s274 + $0x48] sm:$0xff]
      %v312 = vld [vmem:[%s274 + $0x50] sm:$0xff]
      %v313 = vld [vmem:[%s274 + $0x58] sm:$0xff]
      %v314 = vld [vmem:[%s274 + $0x60] sm:$0xff]
      %v315 = vld [vmem:[%s274 + $0x68] sm:$0xff]
      %v316 = vld [vmem:[%s274 + $0x70] sm:$0xff]
      %v317 = vld [vmem:[%s274 + $0x78] sm:$0xff]
      %v318 = vld [vmem:[%s274 + $0x80] sm:$0xff]
      %v319 = vld [vmem:[%s274 + $0x88] sm:$0xff]
      %v320 = vld [vmem:[%s274 + $0x90] sm:$0xff]
      %v321 = vld [vmem:[%s274 + $0x98] sm:$0xff]
      %v322 = vld [vmem:[%s274 + $0xa0] sm:$0xff]
      %v323 = vld [vmem:[%s274 + $0xa8] sm:$0xff]
      %v324 = vld [vmem:[%s274 + $0xb0] sm:$0xff]
      %v325 = vld [vmem:[%s274 + $0xb8] sm:$0xff]
      %v326 = vld [vmem:[%s274 + $0xc0] sm:$0xff]
      %v327 = vld [vmem:[%s274 + $0xc8] sm:$0xff]
      %v328 = vld [vmem:[%s274 + $0xd0] sm:$0xff]
      %v329 = vld [vmem:[%s274 + $0xd8] sm:$0xff]
      %v330 = vld [vmem:[%s274 + $0xe0] sm:$0xff]
      %v331 = vld [vmem:[%s274 + $0xe8] sm:$0xff]
      %v332 = vld [vmem:[%s274 + $0xf0] sm:$0xff]
      %v333 = vld [vmem:[%s274 + $0xf8] sm:$0xff]
      %v334 = vld [vmem:[%s264] sm:$0xff]
      %v335 = vld [vmem:[%s264 + $0x8] sm:$0xff]
      %v336 = vld [vmem:[%s264 + $0x10] sm:$0xff]
      %v337 = vld [vmem:[%s264 + $0x18] sm:$0xff]
      %v338 = vld [vmem:[%s264 + $0x20] sm:$0xff]
      %v339 = vld [vmem:[%s264 + $0x28] sm:$0xff]
      %v340 = vld [vmem:[%s284] sm:$0xff]
      %v341 = vld [vmem:[%s284 + $0x8] sm:$0xff]
      %v342 = vld [vmem:[%s284 + $0x10] sm:$0xff]
      %v343 = vld [vmem:[%s284 + $0x18] sm:$0xff]
      %v344 = vld [vmem:[%s284 + $0x20] sm:$0xff]
      %v345 = vld [vmem:[%s284 + $0x28] sm:$0xff]
      %v346 = vld [vmem:[%s284 + $0x30] sm:$0xff]
      %v347 = vld [vmem:[%s284 + $0x38] sm:$0xff]
      %v348 = vld [vmem:[%s284 + $0x40] sm:$0xff]
      %v349 = vld [vmem:[%s284 + $0x48] sm:$0xff]
      %v350 = vld [vmem:[%s284 + $0x50] sm:$0xff]
      %v351 = vld [vmem:[%s284 + $0x58] sm:$0xff]
      %v352 = vld [vmem:[%s284 + $0x60] sm:$0xff]
      %v353 = vld [vmem:[%s284 + $0x68] sm:$0xff]
      %v354 = vld [vmem:[%s284 + $0x70] sm:$0xff]
      %v355 = vld [vmem:[%s284 + $0x78] sm:$0xff]
      %v356 = vld [vmem:[%s284 + $0x80] sm:$0xff]
      %v357 = vld [vmem:[%s284 + $0x88] sm:$0xff]
      %v358 = vld [vmem:[%s284 + $0x90] sm:$0xff]
      %v359 = vld [vmem:[%s284 + $0x98] sm:$0xff]
      %v360 = vld [vmem:[%s284 + $0xa0] sm:$0xff]
      %v361 = vld [vmem:[%s284 + $0xa8] sm:$0xff]
      %v362 = vld [vmem:[%s284 + $0xb0] sm:$0xff]
      %v363 = vld [vmem:[%s284 + $0xb8] sm:$0xff]
      %v364 = vld [vmem:[%s284 + $0xc0] sm:$0xff]
      %v365 = vld [vmem:[%s284 + $0xc8] sm:$0xff]
      %v366 = vld [vmem:[%s284 + $0xd0] sm:$0xff]
      %v367 = vld [vmem:[%s284 + $0xd8] sm:$0xff]
      %v368 = vld [vmem:[%s284 + $0xe0] sm:$0xff]
      %v369 = vld [vmem:[%s284 + $0xe8] sm:$0xff]
      %v370 = vld [vmem:[%s284 + $0xf0] sm:$0xff]
      %v371 = vld [vmem:[%s284 + $0xf8] sm:$0xff]
      %373 = vset.pattern.permute.xlu0 0
      %374 = vperm.xlu0 %373, %v340
      %v375 = vpop.permute.xlu0 %374
      %378 = vset.pattern.permute.xlu0 0
      %379 = vperm.xlu0 %378, %v341
      %v380 = vpop.permute.xlu0 %379
      %383 = vset.pattern.permute.xlu0 0
      %384 = vperm.xlu0 %383, %v342
      %v385 = vpop.permute.xlu0 %384
      %388 = vset.pattern.permute.xlu0 0
      %389 = vperm.xlu0 %388, %v343
      %v390 = vpop.permute.xlu0 %389
      %393 = vset.pattern.permute.xlu0 0
      %394 = vperm.xlu0 %393, %v344
      %v395 = vpop.permute.xlu0 %394
      %398 = vset.pattern.permute.xlu0 0
      %399 = vperm.xlu0 %398, %v345
      %v400 = vpop.permute.xlu0 %399
      %403 = vset.pattern.permute.xlu0 0
      %404 = vperm.xlu0 %403, %v346
      %v405 = vpop.permute.xlu0 %404
      %408 = vset.pattern.permute.xlu0 0
      %409 = vperm.xlu0 %408, %v347
      %v410 = vpop.permute.xlu0 %409
      %413 = vset.pattern.permute.xlu0 0
      %414 = vperm.xlu0 %413, %v348
      %v415 = vpop.permute.xlu0 %414
      %418 = vset.pattern.permute.xlu0 0
      %419 = vperm.xlu0 %418, %v349
      %v420 = vpop.permute.xlu0 %419
      %423 = vset.pattern.permute.xlu0 0
      %424 = vperm.xlu0 %423, %v350
      %v425 = vpop.permute.xlu0 %424
      %428 = vset.pattern.permute.xlu0 0
      %429 = vperm.xlu0 %428, %v351
      %v430 = vpop.permute.xlu0 %429
      %433 = vset.pattern.permute.xlu0 0
      %434 = vperm.xlu0 %433, %v352
      %v435 = vpop.permute.xlu0 %434
      %438 = vset.pattern.permute.xlu0 0
      %439 = vperm.xlu0 %438, %v353
      %v440 = vpop.permute.xlu0 %439
      %443 = vset.pattern.permute.xlu0 0
      %444 = vperm.xlu0 %443, %v354
      %v445 = vpop.permute.xlu0 %444
      %448 = vset.pattern.permute.xlu0 0
      %449 = vperm.xlu0 %448, %v355
      %v450 = vpop.permute.xlu0 %449
      %453 = vset.pattern.permute.xlu0 0
      %454 = vperm.xlu0 %453, %v356
      %v455 = vpop.permute.xlu0 %454
      %458 = vset.pattern.permute.xlu0 0
      %459 = vperm.xlu0 %458, %v357
      %v460 = vpop.permute.xlu0 %459
      %463 = vset.pattern.permute.xlu0 0
      %464 = vperm.xlu0 %463, %v358
      %v465 = vpop.permute.xlu0 %464
      %468 = vset.pattern.permute.xlu0 0
      %469 = vperm.xlu0 %468, %v359
      %v470 = vpop.permute.xlu0 %469
      %473 = vset.pattern.permute.xlu0 0
      %474 = vperm.xlu0 %473, %v360
      %v475 = vpop.permute.xlu0 %474
      %478 = vset.pattern.permute.xlu0 0
      %479 = vperm.xlu0 %478, %v361
      %v480 = vpop.permute.xlu0 %479
      %483 = vset.pattern.permute.xlu0 0
      %484 = vperm.xlu0 %483, %v362
      %v485 = vpop.permute.xlu0 %484
      %488 = vset.pattern.permute.xlu0 0
      %489 = vperm.xlu0 %488, %v363
      %v490 = vpop.permute.xlu0 %489
      %493 = vset.pattern.permute.xlu0 0
      %494 = vperm.xlu0 %493, %v364
      %v495 = vpop.permute.xlu0 %494
      %498 = vset.pattern.permute.xlu0 0
      %499 = vperm.xlu0 %498, %v365
      %v500 = vpop.permute.xlu0 %499
      %503 = vset.pattern.permute.xlu0 0
      %504 = vperm.xlu0 %503, %v366
      %v505 = vpop.permute.xlu0 %504
      %508 = vset.pattern.permute.xlu0 0
      %509 = vperm.xlu0 %508, %v367
      %v510 = vpop.permute.xlu0 %509
      %513 = vset.pattern.permute.xlu0 0
      %514 = vperm.xlu0 %513, %v368
      %v515 = vpop.permute.xlu0 %514
      %518 = vset.pattern.permute.xlu0 0
      %519 = vperm.xlu0 %518, %v369
      %v520 = vpop.permute.xlu0 %519
      %523 = vset.pattern.permute.xlu0 0
      %524 = vperm.xlu0 %523, %v370
      %v525 = vpop.permute.xlu0 %524
      %528 = vset.pattern.permute.xlu0 0
      %529 = vperm.xlu0 %528, %v371
      %v530 = vpop.permute.xlu0 %529
      %vm532 = vcmask 195584
      %v534 = vsel %vm532, %v302, 0
      %v537 = vsel %vm532, %v303, 0
      %v540 = vsel %vm532, %v304, 0
      %v543 = vsel %vm532, %v305, 0
      %v546 = vsel %vm532, %v306, 0
      %v549 = vsel %vm532, %v307, 0
      %v552 = vsel %vm532, %v308, 0
      %v555 = vsel %vm532, %v309, 0
      %v558 = vsel %vm532, %v310, 0
      %v561 = vsel %vm532, %v311, 0
      %v564 = vsel %vm532, %v312, 0
      %v567 = vsel %vm532, %v313, 0
      %v570 = vsel %vm532, %v314, 0
      %v573 = vsel %vm532, %v315, 0
      %v576 = vsel %vm532, %v316, 0
      %v579 = vsel %vm532, %v317, 0
      %v582 = vsel %vm532, %v318, 0
      %v585 = vsel %vm532, %v319, 0
      %v588 = vsel %vm532, %v320, 0
      %v591 = vsel %vm532, %v321, 0
      %v594 = vsel %vm532, %v322, 0
      %v597 = vsel %vm532, %v323, 0
      %v600 = vsel %vm532, %v324, 0
      %v603 = vsel %vm532, %v325, 0
      %v606 = vsel %vm532, %v326, 0
      %v609 = vsel %vm532, %v327, 0
      %v612 = vsel %vm532, %v328, 0
      %v615 = vsel %vm532, %v329, 0
      %v618 = vsel %vm532, %v330, 0
      %v621 = vsel %vm532, %v331, 0
      %v624 = vsel %vm532, %v332, 0
      %v627 = vsel %vm532, %v333, 0
      %629 = vmatprep.subr.mxu0 %v335
      %630 = vmatpush1.msra.mxu0 %v334
      %631 = vmatprep.subr.mxu0 %v337
      %632 = vmatpush1.msra.mxu0 %v336
      %633 = vmatprep.subr.mxu0 %v339
      %634 = vmatpush1.msra.mxu0 %v338
      %635 = vmatprep.subr.mxu0 0.0
      %636 = vmatpush1.msra.mxu0 0.0
      %637 = vmatprep.subr.mxu0 0.0
      %638 = vmatpush1.msra.mxu0 0.0
      %639 = vmatprep.subr.mxu0 0.0
      %640 = vmatpush1.msra.mxu0 0.0
      %641 = vmatprep.subr.mxu0 0.0
      %642 = vmatpush1.msra.mxu0 0.0
      %643 = vmatprep.subr.mxu0 0.0
      %644 = vmatpush1.msra.mxu0 0.0
      %645 = vmatprep.subr.mxu0 0.0
      %646 = vmatpush1.msra.mxu0 0.0
      %647 = vmatprep.subr.mxu0 0.0
      %648 = vmatpush1.msra.mxu0 0.0
      %649 = vmatprep.subr.mxu0 0.0
      %650 = vmatpush1.msra.mxu0 0.0
      %651 = vmatprep.subr.mxu0 0.0
      %652 = vmatpush1.msra.mxu0 0.0
      %653 = vmatprep.subr.mxu0 0.0
      %654 = vmatpush1.msra.mxu0 0.0
      %655 = vmatprep.subr.mxu0 0.0
      %656 = vmatpush1.msra.mxu0 0.0
      %657 = vmatprep.subr.mxu0 0.0
      %658 = vmatpush1.msra.mxu0 0.0
      %659 = vmatprep.subr.mxu0 0.0
      %660 = vmatpush1.msra.mxu0 0.0
      %661 = vmatprep.subr.mxu0 0.0
      %662 = vmatpush1.msra.mxu0 0.0
      %663 = vmatprep.subr.mxu0 0.0
      %664 = vmatpush1.msra.mxu0 0.0
      %665 = vmatprep.subr.mxu0 0.0
      %666 = vmatpush1.msra.mxu0 0.0
      %667 = vmatprep.subr.mxu0 0.0
      %668 = vmatpush1.msra.mxu0 0.0
      %669 = vmatprep.subr.mxu0 0.0
      %670 = vmatpush1.msra.mxu0 0.0
      %671 = vmatprep.subr.mxu0 0.0
      %672 = vmatpush1.msra.mxu0 0.0
      %673 = vmatprep.subr.mxu0 0.0
      %674 = vmatpush1.msra.mxu0 0.0
      %675 = vmatprep.subr.mxu0 0.0
      %676 = vmatpush1.msra.mxu0 0.0
      %677 = vmatprep.subr.mxu0 0.0
      %678 = vmatpush1.msra.mxu0 0.0
      %679 = vmatprep.subr.mxu0 0.0
      %680 = vmatpush1.msra.mxu0 0.0
      %681 = vmatprep.subr.mxu0 0.0
      %682 = vmatpush1.msra.mxu0 0.0
      %683 = vmatprep.subr.mxu0 0.0
      %684 = vmatpush1.msra.mxu0 0.0
      %685 = vmatprep.subr.mxu0 0.0
      %686 = vmatpush1.msra.mxu0 0.0
      %687 = vmatprep.subr.mxu0 0.0
      %688 = vmatpush1.msra.mxu0 0.0
      %689 = vmatprep.subr.mxu0 0.0
      %690 = vmatpush1.msra.mxu0 0.0
      %691 = vmatprep.subr.mxu0 0.0
      %692 = vmatpush1.msra.mxu0 0.0
      %693 = vmatprep.mubr.f32.mxu0 0.0
      %694 = vmatmul.mubr.f32.gmra.mrb[0].mxu0 %v534
      %v695 = vpop.f32.mrb[0].mxu0
      %v696 = vadd.f32 %v375, %v695
      %v697 = vpop.f32.mrb[0].mxu0
      %v698 = vadd.f32 %v375, %v697
      %699 = vmatprep.mubr.f32.mxu0 0.0
      %700 = vmatmul.mubr.f32.gmra.mrb[0].mxu0 %v537
      %v701 = vpop.f32.mrb[0].mxu0
      %v702 = vadd.f32 %v380, %v701
      %v703 = vpop.f32.mrb[0].mxu0
      %v704 = vadd.f32 %v380, %v703
      %705 = vmatprep.mubr.f32.mxu0 0.0
      %706 = vmatmul.mubr.f32.gmra.mrb[0].mxu0 %v540
      %v707 = vpop.f32.mrb[0].mxu0
      %v708 = vadd.f32 %v385, %v707
      %v709 = vpop.f32.mrb[0].mxu0
      %v710 = vadd.f32 %v385, %v709
      %711 = vmatprep.mubr.f32.mxu0 0.0
      %712 = vmatmul.mubr.f32.gmra.mrb[0].mxu0 %v543
      %v713 = vpop.f32.mrb[0].mxu0
      %v714 = vadd.f32 %v390, %v713
      %v715 = vpop.f32.mrb[0].mxu0
      %v716 = vadd.f32 %v390, %v715
      %717 = vmatprep.mubr.f32.mxu0 0.0
      %718 = vmatmul.mubr.f32.gmra.mrb[0].mxu0 %v546
      %v719 = vpop.f32.mrb[0].mxu0
      %v720 = vadd.f32 %v395, %v719
      %v721 = vpop.f32.mrb[0].mxu0
      %v722 = vadd.f32 %v395, %v721
      %723 = vmatprep.mubr.f32.mxu0 0.0
      %724 = vmatmul.mubr.f32.gmra.mrb[0].mxu0 %v549
      %v725 = vpop.f32.mrb[0].mxu0
      %v726 = vadd.f32 %v400, %v725
      %v727 = vpop.f32.mrb[0].mxu0
      %v728 = vadd.f32 %v400, %v727
      %729 = vmatprep.mubr.f32.mxu0 0.0
      %730 = vmatmul.mubr.f32.gmra.mrb[0].mxu0 %v552
      %v731 = vpop.f32.mrb[0].mxu0
      %v732 = vadd.f32 %v405, %v731
      %v733 = vpop.f32.mrb[0].mxu0
      %v734 = vadd.f32 %v405, %v733
      %735 = vmatprep.mubr.f32.mxu0 0.0
      %736 = vmatmul.mubr.f32.gmra.mrb[0].mxu0 %v555
      %v737 = vpop.f32.mrb[0].mxu0
      %v738 = vadd.f32 %v410, %v737
      %v739 = vpop.f32.mrb[0].mxu0
      %v740 = vadd.f32 %v410, %v739
      %741 = vmatprep.mubr.f32.mxu0 0.0
      %742 = vmatmul.mubr.f32.gmra.mrb[0].mxu0 %v558
      %v743 = vpop.f32.mrb[0].mxu0
      %v744 = vadd.f32 %v415, %v743
      %v745 = vpop.f32.mrb[0].mxu0
      %v746 = vadd.f32 %v415, %v745
      %747 = vmatprep.mubr.f32.mxu0 0.0
      %748 = vmatmul.mubr.f32.gmra.mrb[0].mxu0 %v561
      %v749 = vpop.f32.mrb[0].mxu0
      %v750 = vadd.f32 %v420, %v749
      %v751 = vpop.f32.mrb[0].mxu0
      %v752 = vadd.f32 %v420, %v751
      %753 = vmatprep.mubr.f32.mxu0 0.0
      %754 = vmatmul.mubr.f32.gmra.mrb[0].mxu0 %v564
      %v755 = vpop.f32.mrb[0].mxu0
      %v756 = vadd.f32 %v425, %v755
      %v757 = vpop.f32.mrb[0].mxu0
      %v758 = vadd.f32 %v425, %v757
      %759 = vmatprep.mubr.f32.mxu0 0.0
      %760 = vmatmul.mubr.f32.gmra.mrb[0].mxu0 %v567
      %v761 = vpop.f32.mrb[0].mxu0
      %v762 = vadd.f32 %v430, %v761
      %v763 = vpop.f32.mrb[0].mxu0
      %v764 = vadd.f32 %v430, %v763
      %765 = vmatprep.mubr.f32.mxu0 0.0
      %766 = vmatmul.mubr.f32.gmra.mrb[0].mxu0 %v570
      %v767 = vpop.f32.mrb[0].mxu0
      %v768 = vadd.f32 %v435, %v767
      %v769 = vpop.f32.mrb[0].mxu0
      %v770 = vadd.f32 %v435, %v769
      %771 = vmatprep.mubr.f32.mxu0 0.0
      %772 = vmatmul.mubr.f32.gmra.mrb[0].mxu0 %v573
      %v773 = vpop.f32.mrb[0].mxu0
      %v774 = vadd.f32 %v440, %v773
      %v775 = vpop.f32.mrb[0].mxu0
      %v776 = vadd.f32 %v440, %v775
      %777 = vmatprep.mubr.f32.mxu0 0.0
      %778 = vmatmul.mubr.f32.gmra.mrb[0].mxu0 %v576
      %v779 = vpop.f32.mrb[0].mxu0
      %v780 = vadd.f32 %v445, %v779
      %v781 = vpop.f32.mrb[0].mxu0
      %v782 = vadd.f32 %v445, %v781
      %783 = vmatprep.mubr.f32.mxu0 0.0
      %784 = vmatmul.mubr.f32.gmra.mrb[0].mxu0 %v579
      %v785 = vpop.f32.mrb[0].mxu0
      %v786 = vadd.f32 %v450, %v785
      %v787 = vpop.f32.mrb[0].mxu0
      %v788 = vadd.f32 %v450, %v787
      %789 = vmatprep.mubr.f32.mxu0 0.0
      %790 = vmatmul.mubr.f32.gmra.mrb[0].mxu0 %v582
      %v791 = vpop.f32.mrb[0].mxu0
      %v792 = vadd.f32 %v455, %v791
      %v793 = vpop.f32.mrb[0].mxu0
      %v794 = vadd.f32 %v455, %v793
      %795 = vmatprep.mubr.f32.mxu0 0.0
      %796 = vmatmul.mubr.f32.gmra.mrb[0].mxu0 %v585
      %v797 = vpop.f32.mrb[0].mxu0
      %v798 = vadd.f32 %v460, %v797
      %v799 = vpop.f32.mrb[0].mxu0
      %v800 = vadd.f32 %v460, %v799
      %801 = vmatprep.mubr.f32.mxu0 0.0
      %802 = vmatmul.mubr.f32.gmra.mrb[0].mxu0 %v588
      %v803 = vpop.f32.mrb[0].mxu0
      %v804 = vadd.f32 %v465, %v803
      %v805 = vpop.f32.mrb[0].mxu0
      %v806 = vadd.f32 %v465, %v805
      %807 = vmatprep.mubr.f32.mxu0 0.0
      %808 = vmatmul.mubr.f32.gmra.mrb[0].mxu0 %v591
      %v809 = vpop.f32.mrb[0].mxu0
      %v810 = vadd.f32 %v470, %v809
      %v811 = vpop.f32.mrb[0].mxu0
      %v812 = vadd.f32 %v470, %v811
      %813 = vmatprep.mubr.f32.mxu0 0.0
      %814 = vmatmul.mubr.f32.gmra.mrb[0].mxu0 %v594
      %v815 = vpop.f32.mrb[0].mxu0
      %v816 = vadd.f32 %v475, %v815
      %v817 = vpop.f32.mrb[0].mxu0
      %v818 = vadd.f32 %v475, %v817
      %819 = vmatprep.mubr.f32.mxu0 0.0
      %820 = vmatmul.mubr.f32.gmra.mrb[0].mxu0 %v597
      %v821 = vpop.f32.mrb[0].mxu0
      %v822 = vadd.f32 %v480, %v821
      %v823 = vpop.f32.mrb[0].mxu0
      %v824 = vadd.f32 %v480, %v823
      %825 = vmatprep.mubr.f32.mxu0 0.0
      %826 = vmatmul.mubr.f32.gmra.mrb[0].mxu0 %v600
      %v827 = vpop.f32.mrb[0].mxu0
      %v828 = vadd.f32 %v485, %v827
      %v829 = vpop.f32.mrb[0].mxu0
      %v830 = vadd.f32 %v485, %v829
      %831 = vmatprep.mubr.f32.mxu0 0.0
      %832 = vmatmul.mubr.f32.gmra.mrb[0].mxu0 %v603
      %v833 = vpop.f32.mrb[0].mxu0
      %v834 = vadd.f32 %v490, %v833
      %v835 = vpop.f32.mrb[0].mxu0
      %v836 = vadd.f32 %v490, %v835
      %837 = vmatprep.mubr.f32.mxu0 0.0
      %838 = vmatmul.mubr.f32.gmra.mrb[0].mxu0 %v606
      %v839 = vpop.f32.mrb[0].mxu0
      %v840 = vadd.f32 %v495, %v839
      %v841 = vpop.f32.mrb[0].mxu0
      %v842 = vadd.f32 %v495, %v841
      %843 = vmatprep.mubr.f32.mxu0 0.0
      %844 = vmatmul.mubr.f32.gmra.mrb[0].mxu0 %v609
      %v845 = vpop.f32.mrb[0].mxu0
      %v846 = vadd.f32 %v500, %v845
      %v847 = vpop.f32.mrb[0].mxu0
      %v848 = vadd.f32 %v500, %v847
      %849 = vmatprep.mubr.f32.mxu0 0.0
      %850 = vmatmul.mubr.f32.gmra.mrb[0].mxu0 %v612
      %v851 = vpop.f32.mrb[0].mxu0
      %v852 = vadd.f32 %v505, %v851
      %v853 = vpop.f32.mrb[0].mxu0
      %v854 = vadd.f32 %v505, %v853
      %855 = vmatprep.mubr.f32.mxu0 0.0
      %856 = vmatmul.mubr.f32.gmra.mrb[0].mxu0 %v615
      %v857 = vpop.f32.mrb[0].mxu0
      %v858 = vadd.f32 %v510, %v857
      %v859 = vpop.f32.mrb[0].mxu0
      %v860 = vadd.f32 %v510, %v859
      %861 = vmatprep.mubr.f32.mxu0 0.0
      %862 = vmatmul.mubr.f32.gmra.mrb[0].mxu0 %v618
      %v863 = vpop.f32.mrb[0].mxu0
      %v864 = vadd.f32 %v515, %v863
      %v865 = vpop.f32.mrb[0].mxu0
      %v866 = vadd.f32 %v515, %v865
      %867 = vmatprep.mubr.f32.mxu0 0.0
      %868 = vmatmul.mubr.f32.gmra.mrb[0].mxu0 %v621
      %v869 = vpop.f32.mrb[0].mxu0
      %v870 = vadd.f32 %v520, %v869
      %v871 = vpop.f32.mrb[0].mxu0
      %v872 = vadd.f32 %v520, %v871
      %873 = vmatprep.mubr.f32.mxu0 0.0
      %874 = vmatmul.mubr.f32.gmra.mrb[0].mxu0 %v624
      %v875 = vpop.f32.mrb[0].mxu0
      %v876 = vadd.f32 %v525, %v875
      %v877 = vpop.f32.mrb[0].mxu0
      %v878 = vadd.f32 %v525, %v877
      %879 = vmatprep.mubr.f32.mxu0 0.0
      %880 = vmatmul.mubr.f32.gmra.mrb[0].mxu0 %v627
      %v881 = vpop.f32.mrb[0].mxu0
      %v882 = vadd.f32 %v530, %v881
      %v883 = vpop.f32.mrb[0].mxu0
      %v884 = vadd.f32 %v530, %v883
      %885 = vdwg.mxu0
      %886 = vst [vmem:[%s299] sm:$0xff] %v696
      %887 = vst [vmem:[%s299 + $0x8] sm:$0xff] %v698
      %888 = vst [vmem:[%s299 + $0x10] sm:$0xff] %v702
      %889 = vst [vmem:[%s299 + $0x18] sm:$0xff] %v704
      %890 = vst [vmem:[%s299 + $0x20] sm:$0xff] %v708
      %891 = vst [vmem:[%s299 + $0x28] sm:$0xff] %v710
      %892 = vst [vmem:[%s299 + $0x30] sm:$0xff] %v714
      %893 = vst [vmem:[%s299 + $0x38] sm:$0xff] %v716
      %894 = vst [vmem:[%s299 + $0x40] sm:$0xff] %v720
      %895 = vst [vmem:[%s299 + $0x48] sm:$0xff] %v722
      %896 = vst [vmem:[%s299 + $0x50] sm:$0xff] %v726
      %897 = vst [vmem:[%s299 + $0x58] sm:$0xff] %v728
      %898 = vst [vmem:[%s299 + $0x60] sm:$0xff] %v732
      %899 = vst [vmem:[%s299 + $0x68] sm:$0xff] %v734
      %900 = vst [vmem:[%s299 + $0x70] sm:$0xff] %v738
      %901 = vst [vmem:[%s299 + $0x78] sm:$0xff] %v740
      %902 = vst [vmem:[%s299 + $0x80] sm:$0xff] %v744
      %903 = vst [vmem:[%s299 + $0x88] sm:$0xff] %v746
      %904 = vst [vmem:[%s299 + $0x90] sm:$0xff] %v750
      %905 = vst [vmem:[%s299 + $0x98] sm:$0xff] %v752
      %906 = vst [vmem:[%s299 + $0xa0] sm:$0xff] %v756
      %907 = vst [vmem:[%s299 + $0xa8] sm:$0xff] %v758
      %908 = vst [vmem:[%s299 + $0xb0] sm:$0xff] %v762
      %909 = vst [vmem:[%s299 + $0xb8] sm:$0xff] %v764
      %910 = vst [vmem:[%s299 + $0xc0] sm:$0xff] %v768
      %911 = vst [vmem:[%s299 + $0xc8] sm:$0xff] %v770
      %912 = vst [vmem:[%s299 + $0xd0] sm:$0xff] %v774
      %913 = vst [vmem:[%s299 + $0xd8] sm:$0xff] %v776
      %914 = vst [vmem:[%s299 + $0xe0] sm:$0xff] %v780
      %915 = vst [vmem:[%s299 + $0xe8] sm:$0xff] %v782
      %916 = vst [vmem:[%s299 + $0xf0] sm:$0xff] %v786
      %917 = vst [vmem:[%s299 + $0xf8] sm:$0xff] %v788
      %918 = vst [vmem:[%s299 + $0x100] sm:$0xff] %v792
      %919 = vst [vmem:[%s299 + $0x108] sm:$0xff] %v794
      %920 = vst [vmem:[%s299 + $0x110] sm:$0xff] %v798
      %921 = vst [vmem:[%s299 + $0x118] sm:$0xff] %v800
      %922 = vst [vmem:[%s299 + $0x120] sm:$0xff] %v804
      %923 = vst [vmem:[%s299 + $0x128] sm:$0xff] %v806
      %924 = vst [vmem:[%s299 + $0x130] sm:$0xff] %v810
      %925 = vst [vmem:[%s299 + $0x138] sm:$0xff] %v812
      %926 = vst [vmem:[%s299 + $0x140] sm:$0xff] %v816
      %927 = vst [vmem:[%s299 + $0x148] sm:$0xff] %v818
      %928 = vst [vmem:[%s299 + $0x150] sm:$0xff] %v822
      %929 = vst [vmem:[%s299 + $0x158] sm:$0xff] %v824
      %930 = vst [vmem:[%s299 + $0x160] sm:$0xff] %v828
      %931 = vst [vmem:[%s299 + $0x168] sm:$0xff] %v830
      %932 = vst [vmem:[%s299 + $0x170] sm:$0xff] %v834
      %933 = vst [vmem:[%s299 + $0x178] sm:$0xff] %v836
      %934 = vst [vmem:[%s299 + $0x180] sm:$0xff] %v840
      %935 = vst [vmem:[%s299 + $0x188] sm:$0xff] %v842
      %936 = vst [vmem:[%s299 + $0x190] sm:$0xff] %v846
      %937 = vst [vmem:[%s299 + $0x198] sm:$0xff] %v848
      %938 = vst [vmem:[%s299 + $0x1a0] sm:$0xff] %v852
      %939 = vst [vmem:[%s299 + $0x1a8] sm:$0xff] %v854
      %940 = vst [vmem:[%s299 + $0x1b0] sm:$0xff] %v858
      %941 = vst [vmem:[%s299 + $0x1b8] sm:$0xff] %v860
      %942 = vst [vmem:[%s299 + $0x1c0] sm:$0xff] %v864
      %943 = vst [vmem:[%s299 + $0x1c8] sm:$0xff] %v866
      %944 = vst [vmem:[%s299 + $0x1d0] sm:$0xff] %v870
      %945 = vst [vmem:[%s299 + $0x1d8] sm:$0xff] %v872
      %946 = vst [vmem:[%s299 + $0x1e0] sm:$0xff] %v876
      %947 = vst [vmem:[%s299 + $0x1e8] sm:$0xff] %v878
      %948 = vst [vmem:[%s299 + $0x1f0] sm:$0xff] %v882
      %949 = vst [vmem:[%s299 + $0x1f8] sm:$0xff] %v884
      %s950 = smul.u32 32, %s20
      %s951 = smul.u32 2, %s21
      %p952 = scmp.lt.s32.totalorder %s19, 1
      %s953 = scalar_select %p952, %s19, 1
      %p954 = scmp.lt.s32.totalorder %s950, 31
      %s955 = scalar_select %p954, %s950, 31
      %p956 = scmp.lt.s32.totalorder %s951, 1
      %s957 = scalar_select %p956, %s951, 1
      %s958 = smul.addr %s955, 2
      %s959 = sadd.s32 %s957, %s958
      %s960 = smul.addr %s953, 64
      %s961 = sadd.s32 %s959, %s960
      %s962 = smul.addr %s961, 8
      %s963 = scalar_lea.vmem %s3, %s962
      // Predicated region
      $region33: #{_lambda_.1} parent=31 // pred_check
        %p964 = pneg %p139
      $region34: #{_lambda_.1} parent=31 // pred_check_branch
        %966 = sbr.rel (%p964) target = $region36
      $region35: #{_lambda_.1} parent=31 // pred_region
        %s967 = smul.u32 32, %s20
        %s968 = smul.u32 2, %s21
      $region36: #{_lambda_.1} parent=31 // pred_fallthru
        _
    $region32: #{_lambda_.1} parent=5 // pred_fallthru
      _
    %p969 = scmp.le.s32.totalorder 2, %s9
    // Predicated region
    $region37: #{_lambda_.1} parent=5 // pred_check
      %p970 = pneg %p969
    $region38: #{_lambda_.1} parent=5 // pred_check_branch
      %972 = sbr.rel (%p970) target = $region40
    $region39: #{_lambda_.1} parent=5 // pred_region
      %s973 = ssub.s32 %s9, 2
      // Predicated region
      $region41: #{_lambda_.1} parent=39 // pred_check
        %p974 = pneg %p145
      $region42: #{_lambda_.1} parent=39 // pred_check_branch
        %976 = sbr.rel (%p974) target = $region44
      $region43: #{_lambda_.1} parent=39 // pred_region
        %s977 = smul.u32 32, %s23
        %s978 = smul.u32 2, %s24
        %p979 = scmp.lt.s32.totalorder %s22, 1
        %s980 = scalar_select %p979, %s22, 1
        %p981 = scmp.lt.s32.totalorder %s977, 31
        %s982 = scalar_select %p981, %s977, 31
        %p983 = scmp.lt.s32.totalorder %s978, 1
        %s984 = scalar_select %p983, %s978, 1
        %s985 = smul.addr %s982, 2
        %s986 = sadd.s32 %s984, %s985
        %s987 = smul.addr %s980, 64
        %s988 = sadd.s32 %s986, %s987
        %s989 = smul.addr %s988, 8
        %s990 = scalar_lea.vmem %s3, %s989
      $region44: #{_lambda_.1} parent=39 // pred_fallthru
        _
    $region40: #{_lambda_.1} parent=5 // pred_fallthru
      _
  $region6: #{_lambda_.1} parent=0 // loop_footer
    %s13 = sadd.s32 1, %s9
  $region7: #{_lambda_.1} parent=0 // loop_footer_branch
    %8 = sbr.rel target = $region3
  $region8: #{_lambda_.1} parent=0 // loop_exit
    _

</llo_original>
